<compile_context>
chip_gen: v7x
topology: tpu7x:2x2x1
jax: 0.10.0
libtpu: 0.0.40
codegen_flags: <defaults>
</compile_context>

<pallas_src>
import functools
from typing import Any, NamedTuple

import numpy as np
import jax
import jax.numpy as jnp
from jax import lax
from jax.experimental import pallas as pl
from jax.experimental.pallas import tpu as pltpu


def _unpack_kernel(off_ref, bs_ref, cs_ref, dense_ref, packed_hbm, out_ref,
                   buf, sem, *, TT, B, D, ROWS, NC, NCPC):
    """One grid step = one chunk of TT time steps on one core.

    off_ref  : SMEM (NC*TT,)   int32  packed-row offset of each (padded) step
    bs_ref   : SMEM (NC*TT,)   int32  batch size of each (padded) step
    cs_ref   : SMEM (NCTOT+1,) int32  clamped HBM row start of each chunk's DMA
    dense_ref: SMEM (NCTOT+1,) int32  1 iff chunk is fully dense (bsz == B)
    packed_hbm : HBM ref (total, D)            (memory_space=pl.ANY)
    out_ref    : VMEM block (B, TT*D)          (time-flattened, batch-first)
    buf        : VMEM scratch (2, ROWS+B, D)   (double buffer + B rows slack)
    sem        : DMA semaphores (2,)
    """
    core = pl.program_id(0)          # which half of the chunks (v7x TensorCore)
    inner = pl.program_id(1)         # chunk index within this core's half
    g = core * NCPC + inner          # global chunk id (may be >= NC: excess)
    slot = inner % 2

    def chunk_dma(chunk_idx, slot_idx):
        return pltpu.make_async_copy(
            packed_hbm.at[pl.ds(cs_ref[chunk_idx], ROWS), :],
            buf.at[slot_idx, pl.ds(0, ROWS), :],
            sem.at[slot_idx],
        )

    # Prime this core's pipeline on its first chunk.
    @pl.when(inner == 0)
    def _prime():
        chunk_dma(g, slot).start()

    # Prefetch the next chunk (if this core has one) before waiting on this
    # one.  For an odd NC the last prefetch on core 1 stages a padded (unused)
    # chunk -- a harmless in-bounds ~1 MiB read that keeps the wait() below
    # unconditional.
    @pl.when(inner + 1 < NCPC)
    def _prefetch():
        chunk_dma(g + 1, (inner + 1) % 2).start()

    # Scalars needed after the wait are read before it (sst->sld forwarding).
    start = cs_ref[g]
    dense = dense_ref[g]

    chunk_dma(g, slot).wait()

    # Skip all output writes for the padded excess chunk (g >= NC): its output
    # block index equals the previous (real) chunk's, so the resident block is
    # flushed unchanged at the end of the grid.
    @pl.when(g < NC)
    def _copy():

        @pl.when(dense == 1)
        def _dense():
            # Fast path: every step in the chunk has all B sequences active and
            # start == offsets[t0]; straight copies with static offsets.
            for lt in range(TT):
                out_ref[:, lt * D:(lt + 1) * D] = buf[slot, lt * B:(lt + 1) * B, :]

        @pl.when(dense == 0)
        def _masked():
            # Hoisted once per chunk: (B, 1) row-activity iota + zero fill.
            b_iota = lax.broadcasted_iota(jnp.int32, (B, 1), 0)
            zeros = jnp.zeros((B, D), out_ref.dtype)
            t0 = g * TT
            # TODO(synk): on v5e with bf16 activations, verify via
            # pl.lower_as_mlir that this select stays bf16 (no f32 upcast).
            for lt in range(TT):
                t = t0 + lt                   # padded time index
                off = off_ref[t]              # packed-row offset of step t
                bsz = bs_ref[t]               # #active sequences at step t
                local = off - start           # offset inside the VMEM chunk
                rows = buf[slot, pl.ds(local, B), :]      # (B, D); tail masked
                out_ref[:, lt * D:(lt + 1) * D] = jnp.where(b_iota < bsz, rows, zeros)


class _Plan(NamedTuple):
    call: Any
    off: Any
    bs: Any
    cs: Any
    dense: Any
    B: int
    T: int
    D: int
    total: int


@functools.lru_cache(maxsize=128)
def _build_plan(lengths_key, D, dtype_name, time_chunk):
    """Host tables + pallas_call, memoized per (lengths, D, dtype, override)."""
    lengths_np = np.asarray(lengths_key, dtype=np.int64)
    dtype = jnp.dtype(dtype_name)
    itemsize = int(dtype.itemsize)

    B = int(lengths_np.shape[0])
    T = int(lengths_np.max())
    total = int(lengths_np.sum())

    assert (lengths_np >= 1).all(), "all lengths must be >= 1"
    assert (np.diff(lengths_np) <= 0).all(), "lengths must be sorted descending"
    # TODO(synk): general D would need lane padding / masked output stores; the
    # kernel assumes D % 128 == 0 (true for typical padded RNN hidden sizes).
    assert D % 128 == 0, "feature dim must be a multiple of 128"

    # ---- VMEM budgeting (generation-aware) --------------------------------
    try:
        vmem_cap = int(pltpu.get_tpu_info().vmem_capacity_bytes)
    except Exception:
        vmem_cap = 64 << 20            # conservative: v7x per-TensorCore VMEM
    # Keep the kernel's footprint well below physical VMEM (Mosaic internals,
    # output writeback pipeline): ~40% of capacity, capped at 48 MiB.
    vmem_budget = min(int(vmem_cap * 0.4), 48 << 20)

    row_bytes = B * D * itemsize       # one (B, D) time-step slab
    # scratch ~= 2*(TT*B + B)*D (input double buffer) + 2*B*TT*D (out blocks)
    tt_vmem = max(1, (vmem_budget - 2 * row_bytes) // (4 * row_bytes))
    # Size the chunk DMA to ~1 MiB: past ~0.5-1 MiB the HBM roofline is reached
    # and the ~0.35 us per-grid-step overhead is amortized.
    target_dma_bytes = 1 << 20
    tt_dma = max(1, -(-target_dma_bytes // row_bytes))
    # Cap at 64 to bound the statically-unrolled copy loop / code size.
    TT = min(T, max(1, total // B), tt_dma, tt_vmem, 64)
    if time_chunk is not None:
        TT = min(TT, max(1, int(time_chunk)))
    TT = max(1, int(TT))

    ROWS = TT * B
    NC = -(-T // TT)                   # number of real chunks
    T_pad = NC * TT

    # Two-core split of the chunks (no-op on single-TC v5e/v6e).
    NCORES = 2 if NC >= 2 else 1
    NCPC = -(-NC // NCORES)            # chunks per core
    NCTOT = NCORES * NCPC              # >= NC; padded "excess" chunks possible

    # ---- Packed-sequence bookkeeping (host-side, lengths are concrete) ----
    t_range = np.arange(T)
    batch_sizes = (lengths_np[None, :] > t_range[:, None]).sum(axis=1).astype(np.int32)
    offsets = np.zeros((T,), np.int32)
    offsets[1:] = np.cumsum(batch_sizes)[:-1].astype(np.int32)

    # Per-time-step tables padded to NC*TT (padded steps: bsz=0 -> all masked).
    off_pad = np.full((T_pad,), offsets[T - 1], np.int32)
    off_pad[:T] = offsets
    bs_pad = np.zeros((T_pad,), np.int32)
    bs_pad[:T] = batch_sizes

    # Per-chunk tables padded to NCTOT+1 (the +1 keeps the traced-but-skipped
    # last prefetch read in bounds).  Chunk DMA starts are clamped so the
    # fixed-size ROWS-row copy always stays inside the packed buffer.
    t0s = np.arange(NC) * TT
    cs = np.full((NCTOT + 1,), max(0, total - ROWS), np.int32)
    cs[:NC] = np.minimum(offsets[t0s], total - ROWS).astype(np.int32)
    dense = np.zeros((NCTOT + 1,), np.int32)
    for c, t0 in enumerate(t0s):
        if t0 + TT <= T and int(batch_sizes[t0 + TT - 1]) == B:
            dense[c] = 1               # every step in the chunk has bsz == B

    # ---- pallas_call -------------------------------------------------------
    kernel = functools.partial(_unpack_kernel, TT=TT, B=B, D=D, ROWS=ROWS,
                               NC=NC, NCPC=NCPC)

    kernel_vmem = itemsize * (2 * (ROWS + B) * D + 2 * B * TT * D)
    vmem_limit = int(min(vmem_cap * 0.9,
                         max(32 << 20, kernel_vmem * 3 // 2 + (4 << 20))))

    cost = pl.CostEstimate(flops=0, transcendentals=0,
                           bytes_accessed=int((total + B * T) * D * itemsize))

    call = pl.pallas_call(
        kernel,
        out_shape=jax.ShapeDtypeStruct((B, T * D), dtype),
        grid_spec=pltpu.PrefetchScalarGridSpec(
            num_scalar_prefetch=4,               # off, bs, chunk_start, dense
            grid=(NCORES, NCPC),
            in_specs=[pl.BlockSpec(memory_space=pl.ANY)],   # packed stays in HBM
            out_specs=pl.BlockSpec(
                (B, TT * D),
                # Excess chunks (odd NC, core 1) repeat the previous block index
                # so the resident (already written) block is flushed untouched.
                lambda core, inner, off, bs, cs_, dn:
                    (0, jnp.minimum(core * NCPC + inner, NC - 1))),
            scratch_shapes=[
                pltpu.VMEM((2, ROWS + B, D), dtype),
                pltpu.SemaphoreType.DMA((2,)),
            ],
        ),
        compiler_params=pltpu.CompilerParams(
            # Core axis parallel (v7x megacore); chunk axis carries the
            # double-buffered DMA state -> arbitrary.
            dimension_semantics=("parallel", "arbitrary"),
            vmem_limit_bytes=vmem_limit,
        ),
        cost_estimate=cost,
    )

    return _Plan(call=call,
                 off=jnp.asarray(off_pad), bs=jnp.asarray(bs_pad),
                 cs=jnp.asarray(cs), dense=jnp.asarray(dense),
                 B=B, T=T, D=D, total=total)


def pad_packed_sequence_pallas(packed_data, lengths, batch_first=True,
                               time_chunk=None):
    """packed_data: [total, D] time-major packed rows (PackedSequence.data).
    lengths: [B] concrete ints, descending-sorted.  Prefer passing host-side
    numpy / lists: the padded shape must be static, and host lengths avoid a
    device->host sync on every call (tables and the kernel are memoized per
    lengths configuration either way)."""
    if isinstance(lengths, jax.Array):
        lengths = jax.device_get(lengths)
    lengths_np = np.asarray(lengths)
    D = int(packed_data.shape[-1])

    plan = _build_plan(tuple(int(x) for x in lengths_np.reshape(-1)), D,
                       jnp.dtype(packed_data.dtype).name,
                       None if time_chunk is None else int(time_chunk))
    assert int(packed_data.shape[0]) == plan.total, \
        "packed rows must equal sum(lengths)"

    out_flat = plan.call(plan.off, plan.bs, plan.cs, plan.dense, packed_data)
    # Free reshape (trailing-dim split, no data movement) to [B, T, D].
    out = out_flat.reshape(plan.B, plan.T, plan.D)
    return out if batch_first else jnp.transpose(out, (1, 0, 2))


def _reference_unpack(packed, lengths):
    packed = np.asarray(packed)
    lengths = np.asarray(lengths)
    B = int(lengths.shape[0])
    T = int(lengths.max())
    D = int(packed.shape[-1])
    out = np.zeros((B, T, D), packed.dtype)
    idx = 0
    for t in range(T):
        for b in range(B):
            if lengths[b] > t:
                out[b, t] = packed[idx]
                idx += 1
    return out


def _check(packed, lengths, **kw):
    out = jax.block_until_ready(pad_packed_sequence_pallas(packed, lengths, **kw))
    ref = _reference_unpack(np.asarray(packed), np.asarray(lengths))
    assert out.shape == ref.shape, (out.shape, ref.shape)
    assert np.allclose(np.asarray(out, np.float32), ref.astype(np.float32),
                       atol=1e-6, rtol=1e-6), "mismatch vs reference"


if __name__ == "__main__":
    key = jax.random.PRNGKey(0)
    k1, k2, k3, k4 = jax.random.split(key, 4)

    # Case 1: small config; NC=2 -> one chunk per core, masked chunks only.
    lengths1 = jnp.array([8, 7, 6, 5, 4, 3, 2, 1], dtype=jnp.int32)
    packed1 = jax.random.normal(k1, (int(np.asarray(lengths1).sum()), 128),
                                dtype=jnp.float32)
    _check(packed1, lengths1)

    # Case 2: ragged chunks, clamped last-chunk DMA, odd NC -> padded excess
    # chunk on core 1 (skip-write path) + double-buffer prefetch.
    lengths2 = np.array([19, 17, 13, 11, 7, 5, 3, 2], np.int32)
    packed2 = jax.random.normal(k2, (int(lengths2.sum()), 256), dtype=jnp.float32)
    _check(packed2, lengths2)

    # Case 3: equal lengths -> one fully dense chunk, single-core (NC=1) grid.
    lengths3 = np.array([12] * 8, np.int32)
    packed3 = jax.random.normal(k3, (int(lengths3.sum()), 128), dtype=jnp.float32)
    _check(packed3, lengths3)

    # Case 4: forced small chunks -> dense + masked chunks mixed, even NC,
    # two chunks per core (exercises the prefetch + dense fast path together).
    lengths4 = np.array([16, 16, 16, 16, 16, 16, 16, 10], np.int32)
    packed4 = jax.random.normal(k4, (int(lengths4.sum()), 128), dtype=jnp.float32)
    _check(packed4, lengths4, time_chunk=4)

    print("KERNEL_OK")
</pallas_src>

<mosaic_0001>
module attributes {stable_mosaic.version = 11 : i64} {
  func.func @_unpack_kernel(%arg0: i32, %arg1: i32, %arg2: memref<8xi32, #tpu.memory_space<smem>>, %arg3: memref<8xi32, #tpu.memory_space<smem>>, %arg4: memref<3xi32, #tpu.memory_space<smem>>, %arg5: memref<3xi32, #tpu.memory_space<smem>>, %arg6: memref<36x128xf32, #tpu.memory_space<any>>, %arg7: memref<8x512xf32, #tpu.memory_space<vmem>>, %arg8: memref<2x40x128xf32, #tpu.memory_space<vmem>>, %arg9: memref<2x!tpu.dma_semaphore, #tpu.memory_space<semaphore_mem>>) attributes {dimension_semantics = [#tpu.dimension_semantics<parallel>, #tpu.dimension_semantics<arbitrary>], iteration_bounds = array<i64: 2, 1>, scalar_prefetch = 4 : i64, scratch_operands = 2 : i64, tpu.core_type = #tpu.core_type<tc>, window_params = [{}, {transform_indices = @transform_1, window_bounds = array<i64: 8, 512>}]} {
    %c1_i32 = arith.constant 1 : i32
    %0 = arith.muli %arg0, %c1_i32 : i32
    %1 = arith.addi %0, %arg1 : i32
    %c2_i32 = arith.constant 2 : i32
    %c0_i32 = arith.constant 0 : i32
    %2 = arith.cmpi eq, %c2_i32, %c0_i32 : i32
    %c1_i32_0 = arith.constant 1 : i32
    %3 = arith.select %2, %c1_i32_0, %c2_i32 : i32
    %4 = arith.remsi %arg1, %3 : i32
    %c0_i32_1 = arith.constant 0 : i32
    %5 = arith.cmpi ne, %4, %c0_i32_1 : i32
    %c0_i32_2 = arith.constant 0 : i32
    %6 = arith.cmpi slt, %4, %c0_i32_2 : i32
    %c0_i32_3 = arith.constant 0 : i32
    %7 = arith.cmpi slt, %3, %c0_i32_3 : i32
    %8 = arith.xori %6, %7 : i1
    %9 = arith.andi %8, %5 : i1
    %10 = arith.addi %4, %3 : i32
    %11 = arith.select %9, %10, %4 : i32
    %c0_i32_4 = arith.constant 0 : i32
    %12 = arith.cmpi eq, %arg1, %c0_i32_4 : i32
    %13 = arith.extui %12 : i1 to i32
    %c0_i32_5 = arith.constant 0 : i32
    %14 = arith.cmpi ne, %13, %c0_i32_5 : i32
    scf.if %14 {
      %33 = arith.index_cast %1 : i32 to index
      %34 = memref.load %arg4[%33] : memref<3xi32, #tpu.memory_space<smem>>
      %c0_i32_14 = arith.constant 0 : i32
      %35 = tpu.memref_slice %arg6[%34, %c0_i32_14] : memref<36x128xf32, #tpu.memory_space<any>> -> memref<32x128xf32, #tpu.memory_space<any>>
      %c0_i32_15 = arith.constant 0 : i32
      %c0_i32_16 = arith.constant 0 : i32
      %36 = tpu.memref_slice %arg8[%11, %c0_i32_15, %c0_i32_16] : memref<2x40x128xf32, #tpu.memory_space<vmem>> -> memref<1x32x128xf32, #tpu.memory_space<vmem>>
      %37 = tpu.memref_squeeze %36 : memref<1x32x128xf32, #tpu.memory_space<vmem>> -> memref<32x128xf32, #tpu.memory_space<vmem>>
      %38 = tpu.memref_slice %arg9[%11] : memref<2x!tpu.dma_semaphore, #tpu.memory_space<semaphore_mem>> -> memref<1x!tpu.dma_semaphore, #tpu.memory_space<semaphore_mem>>
      %39 = tpu.memref_squeeze %38 : memref<1x!tpu.dma_semaphore, #tpu.memory_space<semaphore_mem>> -> memref<!tpu.dma_semaphore, #tpu.memory_space<semaphore_mem>>
      tpu.enqueue_dma source(%35 : memref<32x128xf32, #tpu.memory_space<any>>) target(%37 : memref<32x128xf32, #tpu.memory_space<vmem>>) target_semaphore(%39 : memref<!tpu.dma_semaphore, #tpu.memory_space<semaphore_mem>>)
    } else {
    }
    %c1_i32_6 = arith.constant 1 : i32
    %15 = arith.addi %arg1, %c1_i32_6 : i32
    %c1_i32_7 = arith.constant 1 : i32
    %16 = arith.cmpi slt, %15, %c1_i32_7 : i32
    %17 = arith.extui %16 : i1 to i32
    %c0_i32_8 = arith.constant 0 : i32
    %18 = arith.cmpi ne, %17, %c0_i32_8 : i32
    scf.if %18 {
      %c1_i32_14 = arith.constant 1 : i32
      %33 = arith.addi %1, %c1_i32_14 : i32
      %c1_i32_15 = arith.constant 1 : i32
      %34 = arith.addi %arg1, %c1_i32_15 : i32
      %c2_i32_16 = arith.constant 2 : i32
      %c0_i32_17 = arith.constant 0 : i32
      %35 = arith.cmpi eq, %c2_i32_16, %c0_i32_17 : i32
      %c1_i32_18 = arith.constant 1 : i32
      %36 = arith.select %35, %c1_i32_18, %c2_i32_16 : i32
      %37 = arith.remsi %34, %36 : i32
      %c0_i32_19 = arith.constant 0 : i32
      %38 = arith.cmpi ne, %37, %c0_i32_19 : i32
      %c0_i32_20 = arith.constant 0 : i32
      %39 = arith.cmpi slt, %37, %c0_i32_20 : i32
      %c0_i32_21 = arith.constant 0 : i32
      %40 = arith.cmpi slt, %36, %c0_i32_21 : i32
      %41 = arith.xori %39, %40 : i1
      %42 = arith.andi %41, %38 : i1
      %43 = arith.addi %37, %36 : i32
      %44 = arith.select %42, %43, %37 : i32
      %45 = arith.index_cast %33 : i32 to index
      %46 = memref.load %arg4[%45] : memref<3xi32, #tpu.memory_space<smem>>
      %c0_i32_22 = arith.constant 0 : i32
      %47 = tpu.memref_slice %arg6[%46, %c0_i32_22] : memref<36x128xf32, #tpu.memory_space<any>> -> memref<32x128xf32, #tpu.memory_space<any>>
      %c0_i32_23 = arith.constant 0 : i32
      %c0_i32_24 = arith.constant 0 : i32
      %48 = tpu.memref_slice %arg8[%44, %c0_i32_23, %c0_i32_24] : memref<2x40x128xf32, #tpu.memory_space<vmem>> -> memref<1x32x128xf32, #tpu.memory_space<vmem>>
      %49 = tpu.memref_squeeze %48 : memref<1x32x128xf32, #tpu.memory_space<vmem>> -> memref<32x128xf32, #tpu.memory_space<vmem>>
      %50 = tpu.memref_slice %arg9[%44] : memref<2x!tpu.dma_semaphore, #tpu.memory_space<semaphore_mem>> -> memref<1x!tpu.dma_semaphore, #tpu.memory_space<semaphore_mem>>
      %51 = tpu.memref_squeeze %50 : memref<1x!tpu.dma_semaphore, #tpu.memory_space<semaphore_mem>> -> memref<!tpu.dma_semaphore, #tpu.memory_space<semaphore_mem>>
      tpu.enqueue_dma source(%47 : memref<32x128xf32, #tpu.memory_space<any>>) target(%49 : memref<32x128xf32, #tpu.memory_space<vmem>>) target_semaphore(%51 : memref<!tpu.dma_semaphore, #tpu.memory_space<semaphore_mem>>)
    } else {
    }
    %19 = arith.index_cast %1 : i32 to index
    %20 = memref.load %arg4[%19] : memref<3xi32, #tpu.memory_space<smem>>
    %21 = arith.index_cast %1 : i32 to index
    %22 = memref.load %arg5[%21] : memref<3xi32, #tpu.memory_space<smem>>
    %23 = arith.index_cast %1 : i32 to index
    %24 = memref.load %arg4[%23] : memref<3xi32, #tpu.memory_space<smem>>
    %c0_i32_9 = arith.constant 0 : i32
    %25 = tpu.memref_slice %arg6[%24, %c0_i32_9] : memref<36x128xf32, #tpu.memory_space<any>> -> memref<32x128xf32, #tpu.memory_space<any>>
    %c0_i32_10 = arith.constant 0 : i32
    %c0_i32_11 = arith.constant 0 : i32
    %26 = tpu.memref_slice %arg8[%11, %c0_i32_10, %c0_i32_11] : memref<2x40x128xf32, #tpu.memory_space<vmem>> -> memref<1x32x128xf32, #tpu.memory_space<vmem>>
    %27 = tpu.memref_squeeze %26 : memref<1x32x128xf32, #tpu.memory_space<vmem>> -> memref<32x128xf32, #tpu.memory_space<vmem>>
    %28 = tpu.memref_slice %arg9[%11] : memref<2x!tpu.dma_semaphore, #tpu.memory_space<semaphore_mem>> -> memref<1x!tpu.dma_semaphore, #tpu.memory_space<semaphore_mem>>
    %29 = tpu.memref_squeeze %28 : memref<1x!tpu.dma_semaphore, #tpu.memory_space<semaphore_mem>> -> memref<!tpu.dma_semaphore, #tpu.memory_space<semaphore_mem>>
    tpu.wait_dma2 semaphore(%29 : memref<!tpu.dma_semaphore, #tpu.memory_space<semaphore_mem>>) src(%25 : memref<32x128xf32, #tpu.memory_space<any>>) dst(%27 : memref<32x128xf32, #tpu.memory_space<vmem>>)
    %c2_i32_12 = arith.constant 2 : i32
    %30 = arith.cmpi slt, %1, %c2_i32_12 : i32
    %31 = arith.extui %30 : i1 to i32
    %c0_i32_13 = arith.constant 0 : i32
    %32 = arith.cmpi ne, %31, %c0_i32_13 : i32
    scf.if %32 {
      %c1_i32_14 = arith.constant 1 : i32
      %33 = arith.cmpi eq, %22, %c1_i32_14 : i32
      %34 = arith.extui %33 : i1 to i32
      %c0_i32_15 = arith.constant 0 : i32
      %35 = arith.cmpi ne, %34, %c0_i32_15 : i32
      scf.if %35 {
        %39 = arith.index_cast %11 : i32 to index
        %c0 = arith.constant 0 : index
        %c0_18 = arith.constant 0 : index
        %40 = vector.load %arg8[%39, %c0, %c0_18] : memref<2x40x128xf32, #tpu.memory_space<vmem>>, vector<1x8x128xf32>
        %41 = vector.shape_cast %40 : vector<1x8x128xf32> to vector<8x128xf32>
        %c0_19 = arith.constant 0 : index
        %c0_20 = arith.constant 0 : index
        %42 = vector.load %arg7[%c0_19, %c0_20] : memref<8x512xf32, #tpu.memory_space<vmem>>, vector<8x128xf32>
        tpu.vector_store %arg7[%c0_19, %c0_20], %41 {strides = array<i32>} : memref<8x512xf32, #tpu.memory_space<vmem>>, vector<8x128xf32>,
        %43 = arith.index_cast %11 : i32 to index
        %c8 = arith.constant 8 : index
        %c0_21 = arith.constant 0 : index
        %44 = vector.load %arg8[%43, %c8, %c0_21] : memref<2x40x128xf32, #tpu.memory_space<vmem>>, vector<1x8x128xf32>
        %45 = vector.shape_cast %44 : vector<1x8x128xf32> to vector<8x128xf32>
        %c0_22 = arith.constant 0 : index
        %c128 = arith.constant 128 : index
        %46 = vector.load %arg7[%c0_22, %c128] : memref<8x512xf32, #tpu.memory_space<vmem>>, vector<8x128xf32>
        tpu.vector_store %arg7[%c0_22, %c128], %45 {strides = array<i32>} : memref<8x512xf32, #tpu.memory_space<vmem>>, vector<8x128xf32>,
        %47 = arith.index_cast %11 : i32 to index
        %c16 = arith.constant 16 : index
        %c0_23 = arith.constant 0 : index
        %48 = vector.load %arg8[%47, %c16, %c0_23] : memref<2x40x128xf32, #tpu.memory_space<vmem>>, vector<1x8x128xf32>
        %49 = vector.shape_cast %48 : vector<1x8x128xf32> to vector<8x128xf32>
        %c0_24 = arith.constant 0 : index
        %c256 = arith.constant 256 : index
        %50 = vector.load %arg7[%c0_24, %c256] : memref<8x512xf32, #tpu.memory_space<vmem>>, vector<8x128xf32>
        tpu.vector_store %arg7[%c0_24, %c256], %49 {strides = array<i32>} : memref<8x512xf32, #tpu.memory_space<vmem>>, vector<8x128xf32>,
        %51 = arith.index_cast %11 : i32 to index
        %c24 = arith.constant 24 : index
        %c0_25 = arith.constant 0 : index
        %52 = vector.load %arg8[%51, %c24, %c0_25] : memref<2x40x128xf32, #tpu.memory_space<vmem>>, vector<1x8x128xf32>
        %53 = vector.shape_cast %52 : vector<1x8x128xf32> to vector<8x128xf32>
        %c0_26 = arith.constant 0 : index
        %c384 = arith.constant 384 : index
        %54 = vector.load %arg7[%c0_26, %c384] : memref<8x512xf32, #tpu.memory_space<vmem>>, vector<8x128xf32>
        tpu.vector_store %arg7[%c0_26, %c384], %53 {strides = array<i32>} : memref<8x512xf32, #tpu.memory_space<vmem>>, vector<8x128xf32>,
      } else {
      }
      %c0_i32_16 = arith.constant 0 : i32
      %36 = arith.cmpi eq, %22, %c0_i32_16 : i32
      %37 = arith.extui %36 : i1 to i32
      %c0_i32_17 = arith.constant 0 : i32
      %38 = arith.cmpi ne, %37, %c0_i32_17 : i32
      scf.if %38 {
        %39 = tpu.iota {dimensions = array<i32: 0>} : vector<8x1xi32>
        %cst = arith.constant 0.000000e+00 : f32
        %40 = vector.broadcast %cst : f32 to vector<8x128xf32>
        %c4_i32 = arith.constant 4 : i32
        %41 = arith.muli %1, %c4_i32 : i32
        %c0_i32_18 = arith.constant 0 : i32
        %42 = arith.addi %41, %c0_i32_18 : i32
        %43 = arith.index_cast %42 : i32 to index
        %44 = memref.load %arg2[%43] : memref<8xi32, #tpu.memory_space<smem>>
        %45 = arith.index_cast %42 : i32 to index
        %46 = memref.load %arg3[%45] : memref<8xi32, #tpu.memory_space<smem>>
        %47 = arith.subi %44, %20 : i32
        %48 = arith.index_cast %11 : i32 to index
        %49 = arith.index_cast %47 : i32 to index
        %c0 = arith.constant 0 : index
        %50 = vector.load %arg8[%48, %49, %c0] : memref<2x40x128xf32, #tpu.memory_space<vmem>>, vector<1x8x128xf32>
        %51 = vector.shape_cast %50 : vector<1x8x128xf32> to vector<8x128xf32>
        %52 = vector.broadcast %46 : i32 to vector<8x1xi32>
        %53 = arith.cmpi slt, %39, %52 : vector<8x1xi32>
        %54 = vector.shape_cast %53 : vector<8x1xi1> to vector<8x1xi1>
        %55 = vector.broadcast %54 : vector<8x1xi1> to vector<8x128xi1>
        %56 = arith.select %55, %51, %40 : vector<8x128xi1>, vector<8x128xf32>
        %c0_19 = arith.constant 0 : index
        %c0_20 = arith.constant 0 : index
        %57 = vector.load %arg7[%c0_19, %c0_20] : memref<8x512xf32, #tpu.memory_space<vmem>>, vector<8x128xf32>
        tpu.vector_store %arg7[%c0_19, %c0_20], %56 {strides = array<i32>} : memref<8x512xf32, #tpu.memory_space<vmem>>, vector<8x128xf32>,
        %c1_i32_21 = arith.constant 1 : i32
        %58 = arith.addi %41, %c1_i32_21 : i32
        %59 = arith.index_cast %58 : i32 to index
        %60 = memref.load %arg2[%59] : memref<8xi32, #tpu.memory_space<smem>>
        %61 = arith.index_cast %58 : i32 to index
        %62 = memref.load %arg3[%61] : memref<8xi32, #tpu.memory_space<smem>>
        %63 = arith.subi %60, %20 : i32
        %64 = arith.index_cast %11 : i32 to index
        %65 = arith.index_cast %63 : i32 to index
        %c0_22 = arith.constant 0 : index
        %66 = vector.load %arg8[%64, %65, %c0_22] : memref<2x40x128xf32, #tpu.memory_space<vmem>>, vector<1x8x128xf32>
        %67 = vector.shape_cast %66 : vector<1x8x128xf32> to vector<8x128xf32>
        %68 = vector.broadcast %62 : i32 to vector<8x1xi32>
        %69 = arith.cmpi slt, %39, %68 : vector<8x1xi32>
        %70 = vector.shape_cast %69 : vector<8x1xi1> to vector<8x1xi1>
        %71 = vector.broadcast %70 : vector<8x1xi1> to vector<8x128xi1>
        %72 = arith.select %71, %67, %40 : vector<8x128xi1>, vector<8x128xf32>
        %c0_23 = arith.constant 0 : index
        %c128 = arith.constant 128 : index
        %73 = vector.load %arg7[%c0_23, %c128] : memref<8x512xf32, #tpu.memory_space<vmem>>, vector<8x128xf32>
        tpu.vector_store %arg7[%c0_23, %c128], %72 {strides = array<i32>} : memref<8x512xf32, #tpu.memory_space<vmem>>, vector<8x128xf32>,
        %c2_i32_24 = arith.constant 2 : i32
        %74 = arith.addi %41, %c2_i32_24 : i32
        %75 = arith.index_cast %74 : i32 to index
        %76 = memref.load %arg2[%75] : memref<8xi32, #tpu.memory_space<smem>>
        %77 = arith.index_cast %74 : i32 to index
        %78 = memref.load %arg3[%77] : memref<8xi32, #tpu.memory_space<smem>>
        %79 = arith.subi %76, %20 : i32
        %80 = arith.index_cast %11 : i32 to index
        %81 = arith.index_cast %79 : i32 to index
        %c0_25 = arith.constant 0 : index
        %82 = vector.load %arg8[%80, %81, %c0_25] : memref<2x40x128xf32, #tpu.memory_space<vmem>>, vector<1x8x128xf32>
        %83 = vector.shape_cast %82 : vector<1x8x128xf32> to vector<8x128xf32>
        %84 = vector.broadcast %78 : i32 to vector<8x1xi32>
        %85 = arith.cmpi slt, %39, %84 : vector<8x1xi32>
        %86 = vector.shape_cast %85 : vector<8x1xi1> to vector<8x1xi1>
        %87 = vector.broadcast %86 : vector<8x1xi1> to vector<8x128xi1>
        %88 = arith.select %87, %83, %40 : vector<8x128xi1>, vector<8x128xf32>
        %c0_26 = arith.constant 0 : index
        %c256 = arith.constant 256 : index
        %89 = vector.load %arg7[%c0_26, %c256] : memref<8x512xf32, #tpu.memory_space<vmem>>, vector<8x128xf32>
        tpu.vector_store %arg7[%c0_26, %c256], %88 {strides = array<i32>} : memref<8x512xf32, #tpu.memory_space<vmem>>, vector<8x128xf32>,
        %c3_i32 = arith.constant 3 : i32
        %90 = arith.addi %41, %c3_i32 : i32
        %91 = arith.index_cast %90 : i32 to index
        %92 = memref.load %arg2[%91] : memref<8xi32, #tpu.memory_space<smem>>
        %93 = arith.index_cast %90 : i32 to index
        %94 = memref.load %arg3[%93] : memref<8xi32, #tpu.memory_space<smem>>
        %95 = arith.subi %92, %20 : i32
        %96 = arith.index_cast %11 : i32 to index
        %97 = arith.index_cast %95 : i32 to index
        %c0_27 = arith.constant 0 : index
        %98 = vector.load %arg8[%96, %97, %c0_27] : memref<2x40x128xf32, #tpu.memory_space<vmem>>, vector<1x8x128xf32>
        %99 = vector.shape_cast %98 : vector<1x8x128xf32> to vector<8x128xf32>
        %100 = vector.broadcast %94 : i32 to vector<8x1xi32>
        %101 = arith.cmpi slt, %39, %100 : vector<8x1xi32>
        %102 = vector.shape_cast %101 : vector<8x1xi1> to vector<8x1xi1>
        %103 = vector.broadcast %102 : vector<8x1xi1> to vector<8x128xi1>
        %104 = arith.select %103, %99, %40 : vector<8x128xi1>, vector<8x128xf32>
        %c0_28 = arith.constant 0 : index
        %c384 = arith.constant 384 : index
        %105 = vector.load %arg7[%c0_28, %c384] : memref<8x512xf32, #tpu.memory_space<vmem>>, vector<8x128xf32>
        tpu.vector_store %arg7[%c0_28, %c384], %104 {strides = array<i32>} : memref<8x512xf32, #tpu.memory_space<vmem>>, vector<8x128xf32>,
      } else {
      }
    } else {
    }
    return
  }
  func.func @transform_1(%arg0: i32, %arg1: i32, %arg2: memref<8xi32, #tpu.memory_space<smem>>, %arg3: memref<8xi32, #tpu.memory_space<smem>>, %arg4: memref<3xi32, #tpu.memory_space<smem>>, %arg5: memref<3xi32, #tpu.memory_space<smem>>) -> (i32, i32) {
    %c1_i32 = arith.constant 1 : i32
    %0 = arith.muli %arg0, %c1_i32 : i32
    %1 = arith.addi %0, %arg1 : i32
    %c1_i32_0 = arith.constant 1 : i32
    %2 = arith.minsi %1, %c1_i32_0 : i32
    %c0_i32 = arith.constant 0 : i32
    %c0_i32_1 = arith.constant 0 : i32
    return %c0_i32, %2 : i32, i32
  }
}

</mosaic_0001>

<llo_original>
// kernel: tpu_custom_call.1
$region0: #{tpu_custom_call.1}
  #allocation0 [shape = 'u32[]', space=smem, size = 0x4, offset = 0x4, fixed_abs, tag = 'smem constant byte address 0x4 - core index']
  #allocation1 [shape = 'u32[144,128]{1,0:T(1,128)}', space=vmem, size = 0x12000, scoped, tag = 'internal scratch']
  #allocation2 [shape = 'f32[2,40,128]{2,1,0:T(8,128)}', space=vmem, size = 0xa000, scoped, tag = 'scratch operand']
  #allocation3 [shape = 's32[2]{0}', space=sflag, size = 0x8, scoped, tag = 'scratch operand']
  #allocation4 [shape = 's32[1]{0}', space=sflag, size = 0x4, scoped, tag = 'scoped memory for tpu_custom_call.1']
  #allocation5 [shape = 'u8[512]{0}', space=smem, size = 0x200, scoped, tag = 'prefetched SMEM operand 0']
  #allocation6 [shape = 'u8[512]{0}', space=smem, size = 0x200, scoped, tag = 'prefetched SMEM operand 1']
  #allocation7 [shape = 'u8[512]{0}', space=smem, size = 0x200, scoped, tag = 'prefetched SMEM operand 2']
  #allocation8 [shape = 'u8[512]{0}', space=smem, size = 0x200, scoped, tag = 'prefetched SMEM operand 3']
  #allocation11 [shape = 's32[]', space=sflag, size = 0x4, offset = 0, fixed_abs, tag = 'sflag constant byte address 0x0 - dummy sync flag']
  #allocation12 [shape = 's32[]', space=sflag, size = 0x4, offset = 0, fixed_abs, tag = 'sflag constant byte address 0x0 - dummy sync flag']
  #allocation13 [shape = 'u32[]', space=smem, size = 0x4, offset = 0x44, fixed_abs, tag = 'smem constant byte address 0x44 - assertion arg 0']
  #allocation14 [shape = 'u32[]', space=smem, size = 0x4, offset = 0x48, fixed_abs, tag = 'smem constant byte address 0x48 - assertion arg 1']
  #allocation15 [shape = 's32[]', space=sflag, size = 0x4, offset = 0, fixed_abs, tag = 'sflag constant byte address 0x0 - dummy sync flag']
  #allocation16 [shape = 's32[]', space=sflag, size = 0x4, offset = 0, fixed_abs, tag = 'sflag constant byte address 0x0 - dummy sync flag']
  %s0 = inlined_call_operand.hbm [shape: s32[8], index: 0, kind: input, shape index: {}]
  %s1 = inlined_call_operand.vmem [shape: s32[8], index: 1, kind: input, shape index: {}]
  %s2 = inlined_call_operand.vmem [shape: s32[3], index: 2, kind: input, shape index: {}]
  %s3 = inlined_call_operand.vmem [shape: s32[3], index: 3, kind: input, shape index: {}]
  %s4 = inlined_call_operand.hbm [shape: f32[36,128], index: 4, kind: input, shape index: {}]
  %s5 = inlined_call_operand.hbm [shape: f32[8,1024], index: 5, kind: output, shape index: {}]
  %s6 = sld [smem:[#allocation0]]
  $region53: #{tpu_custom_call.1} parent=0
    _
  %s8 = ssub.s32 1, %s6
  %s9 = scalar_select 0, %s8, %s6
  %11 = dma.hbm_to_smem %s0, 16, [#allocation5], [#allocation4]
  %s12 = sshll.u32 %s1, 4
  %s13 = int_to_ptr.vmem [resolvable:$true] %s12
  %15 = dma.vmem_to_smem %s13, 16, [#allocation6], [#allocation4]
  %s16 = sshll.u32 %s2, 4
  %s17 = int_to_ptr.vmem [resolvable:$true] %s16
  %19 = dma.vmem_to_smem %s17, 16, [#allocation7], [#allocation4]
  %s20 = sshll.u32 %s3, 4
  %s21 = int_to_ptr.vmem [resolvable:$true] %s20
  %23 = dma.vmem_to_smem %s21, 16, [#allocation8], [#allocation4]
  %24 = dma.done [#allocation4], 64
  %25 = sfence
  $region1: #{tpu_custom_call.1} parent=0
    #allocation9 [shape = 'u8[32768]{0}', space=vmem, size = 0x8000, scoped, tag = 'output window, operand 0']
    #allocation10 [shape = 's32[2]{0}', space=sflag, size = 0x8, scoped, tag = 'scoped memory for tpu_custom_call.1']
    %26 = vsyncpa [#allocation10], 0
    %s27 = scalar_lea.sflag [#allocation10], 1
    %28 = vsyncpa %s27, 0
    loop: start=0, step=1, limit=3
    $region2: #{tpu_custom_call.1} parent=1 // loop_pre_header
      _
    $region3: #{tpu_custom_call.1} parent=1 // loop_header
      %s30 = sphi 0, %s34
      %p31 = scmp.ge.s32.totalorder %s30, 3
      %s36 = sphi 0, %s46
      %s37 = sphi 0, %s42
      %s38 = sphi 0, %s36
      %s39 = sphi 0, %s37
      %s55 = sphi 0, %s57
      %s58 = sphi 0, %s55
      %s68 = sphi 0, %s58
    $region4: #{tpu_custom_call.1} parent=1 // loop_header_branch
      %33 = sbr.rel (%p31) target = $region8
    $region5: #{tpu_custom_call.1} parent=1 // loop_body
      %s35 = ssub.s32 %s30, 1
      %s40 = sadd.s32 1, %s37
      %p41 = scmp.ge.s32.totalorder %s40, 1
      %s42 = scalar_select %p41, 0, %s40
      %s43 = sadd.s32 1, %s36
      %s44 = scalar_select %p41, %s43, %s36
      %p45 = scmp.ge.s32.totalorder %s44, 2
      %s46 = scalar_select %p45, 0, %s44
      %s47 = sadd.s32 %s36, %s37
      %p48 = scmp.lt.s32.totalorder %s47, 1
      %s49 = scalar_select %p48, %s47, 1
      %s50 = sadd.s32 %s46, %s42
      %p51 = scmp.lt.s32.totalorder %s50, 1
      %s52 = scalar_select %p51, %s50, 1
      %s53 = ssub.s32 %s49, %s52
      %p54 = scmp.eq.s32.totalorder %s53, 0
      %s56 = sadd.s32 %s55, 1
      %s57 = scalar_select %p54, %s55, %s56
      %p59 = pneg %p54
      %p60 = scmp.eq.s32.totalorder %s30, 1
      %p61 = por %p59, %p60
      %p62 = scmp.ne.s32.totalorder %s55, %s58
      %p63 = scmp.eq.s32.totalorder %s30, 0
      %p64 = por %p62, %p63
      %p65 = scmp.ne.s32.totalorder %s55, %s58
      %p66 = scmp.eq.s32.totalorder %s35, 1
      %p67 = por %p65, %p66
      %p69 = scmp.ne.s32.totalorder %s58, %s68
      %p70 = scmp.eq.s32.totalorder %s35, 0
      %p71 = por %p69, %p70
      %p72 = scmp.lt.s32.totalorder %s30, 2
      // Predicated region
      $region9: #{tpu_custom_call.1} parent=5 // pred_check
        %p73 = pneg %p72
      $region10: #{tpu_custom_call.1} parent=5 // pred_check_branch
        %75 = sbr.rel (%p73) target = $region12
      $region11: #{tpu_custom_call.1} parent=5 // pred_region
        %p76 = pneg %p64
        %p77 = pneg %p61
        %s78 = sand.u32 %s55, 1
        %s79 = scalar_lea.sflag [#allocation10], %s78
        %s80 = sand.u32 %s55, 1
        %s81 = smul.addr %s80, 32
        %s82 = scalar_lea.vmem [#allocation9], %s81
        %s83 = sadd.s32 %s36, %s37
        %p84 = scmp.lt.s32.totalorder %s83, 1
        %s85 = scalar_select %p84, %s83, 1
        %s86 = smul.u32 4, %s85
        %s87 = sadd.s32 %s36, %s37
        %p88 = scmp.lt.s32.totalorder %s37, 0
        %s89 = ssub.s32 0, %s37
        %s90 = scalar_select %p88, %s89, %s37
        %s91 = sand.u32 %s90, 1
        %s92 = ssub.s32 0, %s91
        %s93 = scalar_select %p88, %s92, %s91
        %p94 = scmp.ne.s32.totalorder %s93, 0
        %p95 = scmp.lt.s32.totalorder %s93, 0
        %p96 = pnand %p95, %p94
        %p97 = pneg %p96
        %s98 = sadd.s32 %s93, 2
        %s99 = scalar_select %p97, %s98, %s93
        %p100 = scmp.eq.s32.totalorder %s37, 0
        // Predicated region
        $region13: #{tpu_custom_call.1} parent=11 // pred_check
          %p101 = pneg %p100
        $region14: #{tpu_custom_call.1} parent=11 // pred_check_branch
          %103 = sbr.rel (%p101) target = $region16
        $region15: #{tpu_custom_call.1} parent=11 // pred_region
          %s104 = sld [smem:[#allocation7 + %s87]]
          %s105 = smul.addr %s104, 16
          %s106 = scalar_lea.hbm %s4, %s105
          %s107 = smul.u32 %s99, 40
          %s108 = scalar_lea.vmem [#allocation2], %s107
          %s109 = scalar_lea.sflag [#allocation3], %s99
          // Predicated region
          $region17: #{tpu_custom_call.1} parent=15 // pred_check
            _
          $region18: #{tpu_custom_call.1} parent=15 // pred_check_branch
            %111 = sbr.rel target = $region20
          $region19: #{tpu_custom_call.1} parent=15 // pred_region
            %112 = sst [smem:[#allocation13]] [#allocation12]
            %113 = sst [smem:[#allocation14]] [#allocation11]
          $region20: #{tpu_custom_call.1} parent=15 // pred_fallthru
            _
          %115 = shalt.err (0)
          %s117 = sshll.u32 %s108, 4
          %s118 = int_to_ptr.vmem [resolvable:$true] %s117
          %120 = dma.hbm_to_vmem [thread:$0]  %s106, 512, %s118, %s109
        $region16: #{tpu_custom_call.1} parent=11 // pred_fallthru
          _
        %s121 = sadd.s32 %s37, 1
        %p122 = scmp.lt.s32.totalorder %s121, 1
        // Predicated region
        $region21: #{tpu_custom_call.1} parent=11 // pred_check
          %p123 = pneg %p122
        $region22: #{tpu_custom_call.1} parent=11 // pred_check_branch
          %125 = sbr.rel (%p123) target = $region24
        $region23: #{tpu_custom_call.1} parent=11 // pred_region
          %s126 = sadd.s32 %s87, 1
          %p127 = scmp.lt.s32.totalorder %s121, 0
          %s128 = ssub.s32 0, %s121
          %s129 = scalar_select %p127, %s128, %s121
          %s130 = sand.u32 %s129, 1
          %s131 = ssub.s32 0, %s130
          %s132 = scalar_select %p127, %s131, %s130
          %p133 = scmp.ne.s32.totalorder %s132, 0
          %p134 = scmp.lt.s32.totalorder %s132, 0
          %p135 = pnand %p134, %p133
          %p136 = pneg %p135
          %s137 = sadd.s32 %s132, 2
          %s138 = scalar_select %p136, %s137, %s132
          %s139 = sld [smem:[#allocation7 + %s126]]
          %s140 = smul.addr %s139, 16
          %s141 = scalar_lea.hbm %s4, %s140
          %s142 = smul.u32 %s138, 40
          %s143 = scalar_lea.vmem [#allocation2], %s142
          %s144 = scalar_lea.sflag [#allocation3], %s138
          // Predicated region
          $region25: #{tpu_custom_call.1} parent=23 // pred_check
            _
          $region26: #{tpu_custom_call.1} parent=23 // pred_check_branch
            %146 = sbr.rel target = $region28
          $region27: #{tpu_custom_call.1} parent=23 // pred_region
            %147 = sst [smem:[#allocation13]] [#allocation16]
            %148 = sst [smem:[#allocation14]] [#allocation15]
          $region28: #{tpu_custom_call.1} parent=23 // pred_fallthru
            _
          %150 = shalt.err (0)
          %s152 = sshll.u32 %s143, 4
          %s153 = int_to_ptr.vmem [resolvable:$true] %s152
          %155 = dma.hbm_to_vmem [thread:$0]  %s141, 512, %s153, %s144
        $region24: #{tpu_custom_call.1} parent=11 // pred_fallthru
          _
        %s156 = sld [smem:[#allocation7 + %s87]]
        %s157 = sld [smem:[#allocation8 + %s87]]
        %s158 = smul.u32 %s99, 40
        %s159 = scalar_lea.vmem [#allocation2], %s158
        %s160 = scalar_lea.sflag [#allocation3], %s99
        %s161 = smul.u32 32, 1
        %s162 = sshll.u32 %s161, 4
        %163 = dma.done %s160, %s162
        %p164 = scmp.lt.s32.totalorder %s87, 2
        // Predicated region
        $region29: #{tpu_custom_call.1} parent=11 // pred_check
          %p165 = pneg %p164
        $region30: #{tpu_custom_call.1} parent=11 // pred_check_branch
          %167 = sbr.rel (%p165) target = $region32
        $region31: #{tpu_custom_call.1} parent=11 // pred_region
          %p168 = scmp.eq.s32.totalorder %s157, 1
          // Predicated region
          $region33: #{tpu_custom_call.1} parent=31 // pred_check
            %p169 = pneg %p168
          $region34: #{tpu_custom_call.1} parent=31 // pred_check_branch
            %171 = sbr.rel (%p169) target = $region36
          $region35: #{tpu_custom_call.1} parent=31 // pred_region
            %v172 = vld [vmem:[%s159] sm:$0xff]
            %173 = vst [vmem:[%s82] sm:$0xff] %v172
            %v174 = vld [vmem:[%s159 + $0x8] sm:$0xff]
            %175 = vst [vmem:[%s82 + $0x8] sm:$0xff] %v174
            %v176 = vld [vmem:[%s159 + $0x10] sm:$0xff]
            %177 = vst [vmem:[%s82 + $0x10] sm:$0xff] %v176
            %v178 = vld [vmem:[%s159 + $0x18] sm:$0xff]
            %179 = vst [vmem:[%s82 + $0x18] sm:$0xff] %v178
          $region36: #{tpu_custom_call.1} parent=31 // pred_fallthru
            _
          %p180 = scmp.eq.s32.totalorder %s157, 0
          // Predicated region
          $region37: #{tpu_custom_call.1} parent=31 // pred_check
            %p181 = pneg %p180
          $region38: #{tpu_custom_call.1} parent=31 // pred_check_branch
            %183 = sbr.rel (%p181) target = $region40
          $region39: #{tpu_custom_call.1} parent=31 // pred_region
            %v184 = vlaneseq
            %v185 = vshrl.u32 %v184, 7
            %s186 = smul.u32 %s87, 4
            %s187 = sld [smem:[#allocation5 + %s186]]
            %s188 = sld [smem:[#allocation6 + %s186]]
            %s189 = ssub.s32 %s187, %s156
            %s190 = sadd.s32 %s189, %s158
            %s191 = scalar_lea.vmem [#allocation2], %s190
            %v192 = vld [vmem:[%s191] sm:$0xff]
            %v193 = vstv %s188
            %vm194 = vcmp.lt.s32.totalorder %v185, %v193
            %v195 = vsel %vm194, 1, 0
            %vm196 = vcmp.eq.s32.totalorder %v195, 1
            %v197 = vsel %vm196, %v192, 0.0
            %198 = vst [vmem:[%s82] sm:$0xff] %v197
            %s199 = sadd.s32 %s186, 1
            %s200 = sld [smem:[#allocation5 + %s199]]
            %s201 = sld [smem:[#allocation6 + %s199]]
            %s202 = ssub.s32 %s200, %s156
            %s203 = sadd.s32 %s202, %s158
            %s204 = scalar_lea.vmem [#allocation2], %s203
            %v205 = vld [vmem:[%s204] sm:$0xff]
            %v206 = vstv %s201
            %vm207 = vcmp.lt.s32.totalorder %v185, %v206
            %v208 = vsel %vm207, 1, 0
            %vm209 = vcmp.eq.s32.totalorder %v208, 1
            %v210 = vsel %vm209, %v205, 0.0
            %211 = vst [vmem:[%s82 + $0x8] sm:$0xff] %v210
            %s212 = sadd.s32 %s186, 2
            %s213 = sld [smem:[#allocation5 + %s212]]
            %s214 = sld [smem:[#allocation6 + %s212]]
            %s215 = ssub.s32 %s213, %s156
            %s216 = sadd.s32 %s215, %s158
            %s217 = scalar_lea.vmem [#allocation2], %s216
            %v218 = vld [vmem:[%s217] sm:$0xff]
            %v219 = vstv %s214
            %vm220 = vcmp.lt.s32.totalorder %v185, %v219
            %v221 = vsel %vm220, 1, 0
            %vm222 = vcmp.eq.s32.totalorder %v221, 1
            %v223 = vsel %vm222, %v218, 0.0
            %224 = vst [vmem:[%s82 + $0x10] sm:$0xff] %v223
            %s225 = sadd.s32 %s186, 3
            %s226 = sld [smem:[#allocation5 + %s225]]
            %s227 = sld [smem:[#allocation6 + %s225]]
            %s228 = ssub.s32 %s226, %s156
            %s229 = sadd.s32 %s228, %s158
            %s230 = scalar_lea.vmem [#allocation2], %s229
            %v231 = vld [vmem:[%s230] sm:$0xff]
            %v232 = vstv %s227
            %vm233 = vcmp.lt.s32.totalorder %v185, %v232
            %v234 = vsel %vm233, 1, 0
            %vm235 = vcmp.eq.s32.totalorder %v234, 1
            %v236 = vsel %vm235, %v231, 0.0
            %237 = vst [vmem:[%s82 + $0x18] sm:$0xff] %v236
          $region40: #{tpu_custom_call.1} parent=31 // pred_fallthru
            _
        $region32: #{tpu_custom_call.1} parent=11 // pred_fallthru
          _
        %s238 = sand.u32 %s55, 1
        %s239 = scalar_lea.sflag [#allocation10], %s238
        %s240 = sand.u32 %s55, 1
        %s241 = smul.addr %s240, 32
        %s242 = scalar_lea.vmem [#allocation9], %s241
        // Predicated region
        $region41: #{tpu_custom_call.1} parent=11 // pred_check
          %p243 = pneg %p61
        $region42: #{tpu_custom_call.1} parent=11 // pred_check_branch
          %245 = sbr.rel (%p243) target = $region44
        $region43: #{tpu_custom_call.1} parent=11 // pred_region
          %s246 = sadd.s32 %s36, %s37
          %p247 = scmp.lt.s32.totalorder %s246, 1
          %s248 = scalar_select %p247, %s246, 1
          %s249 = smul.u32 4, %s248
          %s251 = ssub.s32 512, 512
          %252 = vsyncadd %s239, %s251
          %s253 = smul.addr %s249, 128
          %s254 = scalar_lea.hbm %s5, %s253
          %s256 = sshll.u32 %s242, 4
          %s257 = int_to_ptr.vmem [resolvable:$true] %s256
          %259 = dma.vmem_to_hbm [thread:$0]  %s257, 512, %s254, %s239
        $region44: #{tpu_custom_call.1} parent=11 // pred_fallthru
          _
      $region12: #{tpu_custom_call.1} parent=5 // pred_fallthru
        _
      %p260 = scmp.le.s32.totalorder 1, %s30
      // Predicated region
      $region45: #{tpu_custom_call.1} parent=5 // pred_check
        %p261 = pneg %p260
      $region46: #{tpu_custom_call.1} parent=5 // pred_check_branch
        %263 = sbr.rel (%p261) target = $region48
      $region47: #{tpu_custom_call.1} parent=5 // pred_region
        %s264 = ssub.s32 %s30, 1
        // Predicated region
        $region49: #{tpu_custom_call.1} parent=47 // pred_check
          %p265 = pneg %p67
        $region50: #{tpu_custom_call.1} parent=47 // pred_check_branch
          %267 = sbr.rel (%p265) target = $region52
        $region51: #{tpu_custom_call.1} parent=47 // pred_region
          %s268 = sand.u32 %s58, 1
          %s269 = scalar_lea.sflag [#allocation10], %s268
          %s270 = sand.u32 %s58, 1
          %s271 = smul.addr %s270, 32
          %s272 = scalar_lea.vmem [#allocation9], %s271
          %273 = dma.done %s269, 512
        $region52: #{tpu_custom_call.1} parent=47 // pred_fallthru
          _
      $region48: #{tpu_custom_call.1} parent=5 // pred_fallthru
        _
    $region6: #{tpu_custom_call.1} parent=1 // loop_footer
      %s34 = sadd.s32 1, %s30
    $region7: #{tpu_custom_call.1} parent=1 // loop_footer_branch
      %29 = sbr.rel target = $region3
    $region8: #{tpu_custom_call.1} parent=1 // loop_exit
      _
    %274 = vsyncpa [#allocation10], 1
    %s275 = scalar_lea.sflag [#allocation10], 1
    %276 = vsyncpa %s275, 1
  %277 = vsyncmov [#allocation3]
  %s278 = vpop.sfrf %277
  %p279 = scmp.eq.s32.totalorder %s278, 0
  %p280 = pneg %p279
  %282 = shalt.err (%p280)
  %s283 = scalar_lea.sflag [#allocation3], 1
  %284 = vsyncmov %s283
  %s285 = vpop.sfrf %284
  %p286 = scmp.eq.s32.totalorder %s285, 0
  %p287 = pneg %p286
  %289 = shalt.err (%p287)

</llo_original>
